<compile_context>
chip_gen: v6e
topology: v6e:2x2x1
jax: 0.10.0
libtpu: 0.0.40
codegen_flags: <defaults>
</compile_context>

<pallas_src>
import functools
import math

import jax
import jax.numpy as jnp
from jax.experimental import pallas as pl
from jax.experimental.pallas import tpu as pltpu


def _make_divisible(v, divisor, min_value=None):
    if min_value is None:
        min_value = divisor
    new_v = max(min_value, int(v + divisor / 2) // divisor * divisor)
    if new_v < 0.9 * v:
        new_v += divisor
    return new_v


def _round_up(x, m):
    return ((x + m - 1) // m) * m


def _vmem_capacity_bytes():
    try:
        return int(pltpu.get_tpu_info().vmem_capacity_bytes)
    except Exception:
        return 64 * 1024 * 1024  # conservative default: v7x per-TensorCore VMEM


# ---------------------------------------------------------------------------
# Fused path: one (bt, C, HW) slab per grid step (pool + gate + multiply).
# ---------------------------------------------------------------------------
def _se_fused_kernel(x_ref, w1_ref, b1_ref, w2_ref, b2_ref, o_ref, *, inv_hw):
    # x_ref : (bt, C, HW) native dtype; HW is the TRUE spatial size (no pad)
    # w1_ref: (C, Cr) f32 (conv_reduce weight, transposed)   b1_ref: (1, Cr)
    # w2_ref: (Cr, C) f32 (conv_expand weight, transposed)   b2_ref: (1, C)
    x = x_ref[...]

    # AdaptiveAvgPool2d(1): f32-accumulated mean over the lane axis -> (bt, C)
    pooled = jnp.sum(x, axis=-1, dtype=jnp.float32) * inv_hw

    # conv_reduce (1x1 conv == channel matmul) + bias + ReLU  -> (bt, Cr)
    h = jnp.dot(pooled, w1_ref[...], preferred_element_type=jnp.float32)
    h = jnp.maximum(h + b1_ref[...], 0.0)

    # conv_expand + bias                                       -> (bt, C)
    s = jnp.dot(h, w2_ref[...], preferred_element_type=jnp.float32) + b2_ref[...]

    # hard_sigmoid gate: relu6(s + 3) / 6
    gate = jnp.clip(s + 3.0, 0.0, 6.0) * (1.0 / 6.0)

    # Gate on the native dtype (no full-tile f32 copy of x).
    o_ref[...] = x * gate[:, :, None].astype(x.dtype)


# ---------------------------------------------------------------------------
# Spatially tiled fallback: pool kernel + gating kernel.
# ---------------------------------------------------------------------------
def _pool_kernel(x_ref, sum_ref, *, hw, hw_t):
    # x_ref: (C, hw_t) native dtype; sum_ref: (C, 1) f32 accumulated over j.
    j = pl.program_id(1)

    @pl.when(j == 0)
    def _():
        sum_ref[...] = jnp.zeros_like(sum_ref)

    x = x_ref[...]
    lane = jax.lax.broadcasted_iota(jnp.int32, x.shape, 1)
    valid = (j * hw_t + lane) < hw  # mask the ragged last spatial tile
    xm = jnp.where(valid, x, jnp.zeros_like(x))
    sum_ref[...] += jnp.sum(xm, axis=-1, keepdims=True, dtype=jnp.float32)


def _gate_mul_kernel(x_ref, gate_ref, o_ref):
    # x_ref: (C, hw_t); gate_ref: (C, 1) f32
    o_ref[...] = x_ref[...] * gate_ref[...].astype(o_ref.dtype)


# ---------------------------------------------------------------------------
# Wrapper
# ---------------------------------------------------------------------------
def squeeze_excite(x, w_reduce, b_reduce, w_expand, b_expand,
                   *, block_bytes_budget=None):
    """SqueezeExcite forward.  x: (B, C, H, W) NCHW.
    w_reduce: (Cr, C), b_reduce: (Cr,), w_expand: (C, Cr), b_expand: (C,)."""
    B, C, H, W = x.shape
    HW = H * W
    Cr = w_reduce.shape[0]
    itemsize = x.dtype.itemsize

    # 1x1-conv weights, transposed once in the wrapper (f32, tiny, resident
    # across the grid — no per-step casts inside the kernel).
    w1 = jnp.transpose(w_reduce).astype(jnp.float32)        # (C, Cr)
    w2 = jnp.transpose(w_expand).astype(jnp.float32)        # (Cr, C)
    b1 = b_reduce.astype(jnp.float32).reshape(1, Cr)
    b2 = b_expand.astype(jnp.float32).reshape(1, C)
    w_bytes = (2 * C * Cr + Cr + C) * 4

    # VMEM budget derived from the chip (64 MiB/TC v7x, 128 MiB v5e/v6e),
    # with headroom for Mosaic internal scratch / pipeline buffers.
    vmem_cap = _vmem_capacity_bytes()
    vmem_target = min((vmem_cap * 3) // 4, 96 * 1024 * 1024)
    if block_bytes_budget is None:
        block_bytes_budget = max(
            512 * 1024,
            min(8 * 1024 * 1024, (vmem_target - 2 * w_bytes - (4 << 20)) // 4))

    # Conservative VMEM footprint of one bt=1 (C, HW) slab (tile padding).
    per_bt_bytes = _round_up(C, 8) * _round_up(HW, 128) * itemsize

    # ----- pick bt: batch elements packed per grid step ----------------------
    divisors = [d for d in range(1, B + 1) if B % d == 0]
    fitting = [d for d in divisors
               if d * per_bt_bytes <= block_bytes_budget
               and 4 * d * per_bt_bytes + 2 * w_bytes + (2 << 20) <= vmem_target]

    if fitting:
        # Keep enough grid steps for megacore sharding (v7x: 2 TCs) and so the
        # BlockSpec pipeline has steps to overlap DMA with compute.
        min_grid = min(B, 4)
        good = [d for d in fitting if B // d >= min_grid] or fitting
        bt = max(good)
        G = B // bt
        x_packed = x.reshape(G, bt, C, HW)   # bit-compatible reshape, no HBM copy

        block_bytes = bt * per_bt_bytes
        vmem_limit = int(min(vmem_target,
                             max(16 * 1024 * 1024,
                                 4 * block_bytes + 2 * w_bytes + (4 << 20))))

        out = pl.pallas_call(
            functools.partial(_se_fused_kernel, inv_hw=1.0 / HW),
            out_shape=jax.ShapeDtypeStruct((G, bt, C, HW), x.dtype),
            grid_spec=pltpu.PrefetchScalarGridSpec(
                num_scalar_prefetch=0,
                grid=(G,),
                in_specs=[
                    pl.BlockSpec((pl.Squeezed(), bt, C, HW), lambda g: (g, 0, 0, 0)),
                    pl.BlockSpec((C, Cr), lambda g: (0, 0)),
                    pl.BlockSpec((1, Cr), lambda g: (0, 0)),
                    pl.BlockSpec((Cr, C), lambda g: (0, 0)),
                    pl.BlockSpec((1, C), lambda g: (0, 0)),
                ],
                out_specs=pl.BlockSpec((pl.Squeezed(), bt, C, HW),
                                       lambda g: (g, 0, 0, 0)),
            ),
            compiler_params=pltpu.CompilerParams(
                dimension_semantics=("parallel",),
                vmem_limit_bytes=vmem_limit,
            ),
        )(x_packed, w1, b1, w2, b2)
        return out.reshape(B, C, H, W)

    # ----- spatially tiled fallback: one (C, HW) slab doesn't fit VMEM -------
    # TODO(synk): a manual pl.ANY + double-buffered streaming body could merge
    # these two passes' prologues and add deeper prefetch, but the BlockSpec
    # pipeline already keeps this at 3 HBM passes (pool read, gated read+write).
    lane_bytes = _round_up(C, 8) * 128 * itemsize
    hw_t = max(1, block_bytes_budget // lane_bytes) * 128
    hw_t = max(128, min(hw_t, _round_up(HW, 128)))
    n_hw = pl.cdiv(HW, hw_t)
    x3 = x.reshape(B, C, HW)

    block_bytes = _round_up(C, 8) * hw_t * itemsize
    vmem_limit = int(min(vmem_target,
                         max(16 * 1024 * 1024, 4 * block_bytes + (4 << 20))))

    sums = pl.pallas_call(
        functools.partial(_pool_kernel, hw=HW, hw_t=hw_t),
        out_shape=jax.ShapeDtypeStruct((B, C, 1), jnp.float32),
        grid_spec=pltpu.PrefetchScalarGridSpec(
            num_scalar_prefetch=0,
            grid=(B, n_hw),
            in_specs=[pl.BlockSpec((pl.Squeezed(), C, hw_t), lambda b, j: (b, 0, j))],
            out_specs=pl.BlockSpec((pl.Squeezed(), C, 1), lambda b, j: (b, 0, 0)),
        ),
        compiler_params=pltpu.CompilerParams(
            dimension_semantics=("parallel", "arbitrary"),
            vmem_limit_bytes=vmem_limit,
        ),
    )(x3)

    # Tiny (B, C) gate math in plain JAX (negligible next to the x traffic).
    pooled = sums[:, :, 0] * (1.0 / HW)                              # (B, C)
    h = jnp.maximum(pooled @ w1 + b1, 0.0)                           # (B, Cr)
    s = h @ w2 + b2                                                  # (B, C)
    gate = (jnp.clip(s + 3.0, 0.0, 6.0) * (1.0 / 6.0)).reshape(B, C, 1)

    out3 = pl.pallas_call(
        _gate_mul_kernel,
        out_shape=jax.ShapeDtypeStruct((B, C, HW), x.dtype),
        grid_spec=pltpu.PrefetchScalarGridSpec(
            num_scalar_prefetch=0,
            grid=(B, n_hw),
            in_specs=[pl.BlockSpec((pl.Squeezed(), C, hw_t), lambda b, j: (b, 0, j)),
                      pl.BlockSpec((pl.Squeezed(), C, 1), lambda b, j: (b, 0, 0))],
            out_specs=pl.BlockSpec((pl.Squeezed(), C, hw_t), lambda b, j: (b, 0, j)),
        ),
        compiler_params=pltpu.CompilerParams(
            dimension_semantics=("parallel", "parallel"),
            vmem_limit_bytes=vmem_limit,
        ),
    )(x3, gate)
    return out3.reshape(B, C, H, W)


# ---------------------------------------------------------------------------
# Reference + tests
# ---------------------------------------------------------------------------
def _reference(x, w1, b1, w2, b2):
    # pure-JAX reference of the PyTorch SqueezeExcite forward
    pooled = jnp.mean(x, axis=(2, 3), keepdims=True)                  # (B,C,1,1)
    h = jnp.einsum("rc,bcij->brij", w1, pooled) + b1[None, :, None, None]
    h = jnp.maximum(h, 0.0)
    s = jnp.einsum("cr,brij->bcij", w2, h) + b2[None, :, None, None]
    gate = jnp.clip(s + 3.0, 0.0, 6.0) / 6.0
    return x * gate


def _run_case(key, B, C, H, W, **se_kwargs):
    in_chs = C
    se_ratio = 0.25
    divisor = 4
    reduced_chs = _make_divisible(in_chs * se_ratio, divisor)

    kx, k1, k2, k3, k4 = jax.random.split(key, 5)
    x = jax.random.normal(kx, (B, C, H, W), dtype=jnp.float32)

    bound1 = 1.0 / math.sqrt(in_chs)
    w_reduce = jax.random.uniform(k1, (reduced_chs, in_chs), jnp.float32, -bound1, bound1)
    b_reduce = jax.random.uniform(k2, (reduced_chs,), jnp.float32, -bound1, bound1)
    bound2 = 1.0 / math.sqrt(reduced_chs)
    w_expand = jax.random.uniform(k3, (in_chs, reduced_chs), jnp.float32, -bound2, bound2)
    b_expand = jax.random.uniform(k4, (in_chs,), jnp.float32, -bound2, bound2)

    out = squeeze_excite(x, w_reduce, b_reduce, w_expand, b_expand, **se_kwargs)
    out = jax.block_until_ready(out)

    ref = _reference(x, w_reduce, b_reduce, w_expand, b_expand)
    assert out.shape == (B, C, H, W)
    assert jnp.allclose(out, ref, atol=1e-5, rtol=1e-5), "mismatch vs reference"


if __name__ == "__main__":
    key = jax.random.PRNGKey(0)
    k0, k1, k2, k3 = jax.random.split(key, 4)

    # Primary case (fused path, HW multiple of 128).
    _run_case(k0, B=2, C=4, H=16, W=16)

    # Fused path with HW % 128 != 0 (169): exercises the no-pad/no-slice path
    # with a masked tail store instead of extra HBM copies.
    _run_case(k1, B=3, C=4, H=13, W=13)

    # Fused path with bt > 1 batch packing (B=8 -> bt=2, G=4 grid steps).
    _run_case(k2, B=8, C=4, H=8, W=8)

    # Forced spatially-tiled fallback (tiny budget): pool kernel with ragged
    # lane masking + gating kernel.
    _run_case(k3, B=1, C=8, H=20, W=20, block_bytes_budget=1024)

    print("KERNEL_OK")
</pallas_src>

<mosaic_0001>
module attributes {stable_mosaic.version = 11 : i64} {
  func.func @_se_fused_kernel(%arg0: i32, %arg1: memref<1x1x4x256xf32, #tpu.memory_space<vmem>>, %arg2: memref<4x4xf32, #tpu.memory_space<vmem>>, %arg3: memref<1x4xf32, #tpu.memory_space<vmem>>, %arg4: memref<4x4xf32, #tpu.memory_space<vmem>>, %arg5: memref<1x4xf32, #tpu.memory_space<vmem>>, %arg6: memref<1x1x4x256xf32, #tpu.memory_space<vmem>>) attributes {dimension_semantics = [#tpu.dimension_semantics<parallel>], iteration_bounds = array<i64: 2>, scalar_prefetch = 0 : i64, scratch_operands = 0 : i64, tpu.core_type = #tpu.core_type<tc>, window_params = [{transform_indices = @transform_0, window_bounds = array<i64: 1, 1, 4, 256>}, {pipeline_mode = #tpu.pipeline_mode<synchronous>, transform_indices = @transform_1, window_bounds = array<i64: 4, 4>}, {pipeline_mode = #tpu.pipeline_mode<synchronous>, transform_indices = @transform_2, window_bounds = array<i64: 1, 4>}, {pipeline_mode = #tpu.pipeline_mode<synchronous>, transform_indices = @transform_3, window_bounds = array<i64: 4, 4>}, {pipeline_mode = #tpu.pipeline_mode<synchronous>, transform_indices = @transform_4, window_bounds = array<i64: 1, 4>}, {transform_indices = @transform_5, window_bounds = array<i64: 1, 1, 4, 256>}]} {
    %c0 = arith.constant 0 : index
    %c0_0 = arith.constant 0 : index
    %c0_1 = arith.constant 0 : index
    %c0_2 = arith.constant 0 : index
    %0 = vector.load %arg1[%c0, %c0_0, %c0_1, %c0_2] : memref<1x1x4x256xf32, #tpu.memory_space<vmem>>, vector<1x1x4x256xf32>
    %1 = vector.shape_cast %0 : vector<1x1x4x256xf32> to vector<1x4x256xf32>
    %cst = arith.constant dense<0.000000e+00> : vector<1x4xf32>
    %2 = vector.multi_reduction <add>, %1, %cst [2] : vector<1x4x256xf32> to vector<1x4xf32>
    %cst_3 = arith.constant 3.906250e-03 : f32
    %3 = vector.broadcast %cst_3 : f32 to vector<1x4xf32>
    %4 = arith.mulf %2, %3 : vector<1x4xf32>
    %c0_4 = arith.constant 0 : index
    %c0_5 = arith.constant 0 : index
    %5 = vector.load %arg2[%c0_4, %c0_5] : memref<4x4xf32, #tpu.memory_space<vmem>>, vector<4x4xf32>
    %cst_6 = arith.constant dense<0.000000e+00> : vector<1x4xf32>
    %6 = tpu.matmul %4, %5, %cst_6 {dimension_numbers = #tpu.dot_dimension_numbers<[1], [0], [0], [1], [0, 0, 1, 1], [], []>} : vector<1x4xf32>, vector<4x4xf32>, vector<1x4xf32> -> vector<1x4xf32>
    %c0_7 = arith.constant 0 : index
    %c0_8 = arith.constant 0 : index
    %7 = vector.load %arg3[%c0_7, %c0_8] : memref<1x4xf32, #tpu.memory_space<vmem>>, vector<1x4xf32>
    %8 = arith.addf %6, %7 : vector<1x4xf32>
    %cst_9 = arith.constant 0.000000e+00 : f32
    %9 = vector.broadcast %cst_9 : f32 to vector<1x4xf32>
    %10 = arith.maximumf %8, %9 : vector<1x4xf32>
    %c0_10 = arith.constant 0 : index
    %c0_11 = arith.constant 0 : index
    %11 = vector.load %arg4[%c0_10, %c0_11] : memref<4x4xf32, #tpu.memory_space<vmem>>, vector<4x4xf32>
    %cst_12 = arith.constant dense<0.000000e+00> : vector<1x4xf32>
    %12 = tpu.matmul %10, %11, %cst_12 {dimension_numbers = #tpu.dot_dimension_numbers<[1], [0], [0], [1], [0, 0, 1, 1], [], []>} : vector<1x4xf32>, vector<4x4xf32>, vector<1x4xf32> -> vector<1x4xf32>
    %c0_13 = arith.constant 0 : index
    %c0_14 = arith.constant 0 : index
    %13 = vector.load %arg5[%c0_13, %c0_14] : memref<1x4xf32, #tpu.memory_space<vmem>>, vector<1x4xf32>
    %14 = arith.addf %12, %13 : vector<1x4xf32>
    %cst_15 = arith.constant 3.000000e+00 : f32
    %15 = vector.broadcast %cst_15 : f32 to vector<1x4xf32>
    %16 = arith.addf %14, %15 : vector<1x4xf32>
    %cst_16 = arith.constant 0.000000e+00 : f32
    %cst_17 = arith.constant 6.000000e+00 : f32
    %17 = vector.broadcast %cst_16 : f32 to vector<1x4xf32>
    %18 = arith.maximumf %17, %16 : vector<1x4xf32>
    %19 = vector.broadcast %cst_17 : f32 to vector<1x4xf32>
    %20 = arith.minimumf %19, %18 : vector<1x4xf32>
    %cst_18 = arith.constant 0.166666672 : f32
    %21 = vector.broadcast %cst_18 : f32 to vector<1x4xf32>
    %22 = arith.mulf %20, %21 : vector<1x4xf32>
    %23 = vector.shape_cast %22 : vector<1x4xf32> to vector<1x4x1xf32>
    %24 = vector.broadcast %23 : vector<1x4x1xf32> to vector<1x4x256xf32>
    %25 = arith.mulf %1, %24 : vector<1x4x256xf32>
    %c0_19 = arith.constant 0 : index
    %c0_20 = arith.constant 0 : index
    %c0_21 = arith.constant 0 : index
    %c0_22 = arith.constant 0 : index
    %26 = vector.load %arg6[%c0_19, %c0_20, %c0_21, %c0_22] : memref<1x1x4x256xf32, #tpu.memory_space<vmem>>, vector<1x1x4x256xf32>
    %27 = vector.shape_cast %26 : vector<1x1x4x256xf32> to vector<1x4x256xf32>
    %28 = vector.shape_cast %25 : vector<1x4x256xf32> to vector<1x1x4x256xf32>
    tpu.vector_store %arg6[%c0_19, %c0_20, %c0_21, %c0_22], %28 {strides = array<i32>} : memref<1x1x4x256xf32, #tpu.memory_space<vmem>>, vector<1x1x4x256xf32>,
    return
  }
  func.func @transform_0(%arg0: i32) -> (i32, i32, i32, i32) {
    %c0_i32 = arith.constant 0 : i32
    %c0_i32_0 = arith.constant 0 : i32
    %c0_i32_1 = arith.constant 0 : i32
    %c0_i32_2 = arith.constant 0 : i32
    return %arg0, %c0_i32, %c0_i32_0, %c0_i32_1 : i32, i32, i32, i32
  }
  func.func @transform_1(%arg0: i32) -> (i32, i32) {
    %c0_i32 = arith.constant 0 : i32
    %c0_i32_0 = arith.constant 0 : i32
    %c0_i32_1 = arith.constant 0 : i32
    return %c0_i32, %c0_i32_0 : i32, i32
  }
  func.func @transform_2(%arg0: i32) -> (i32, i32) {
    %c0_i32 = arith.constant 0 : i32
    %c0_i32_0 = arith.constant 0 : i32
    %c0_i32_1 = arith.constant 0 : i32
    return %c0_i32, %c0_i32_0 : i32, i32
  }
  func.func @transform_3(%arg0: i32) -> (i32, i32) {
    %c0_i32 = arith.constant 0 : i32
    %c0_i32_0 = arith.constant 0 : i32
    %c0_i32_1 = arith.constant 0 : i32
    return %c0_i32, %c0_i32_0 : i32, i32
  }
  func.func @transform_4(%arg0: i32) -> (i32, i32) {
    %c0_i32 = arith.constant 0 : i32
    %c0_i32_0 = arith.constant 0 : i32
    %c0_i32_1 = arith.constant 0 : i32
    return %c0_i32, %c0_i32_0 : i32, i32
  }
  func.func @transform_5(%arg0: i32) -> (i32, i32, i32, i32) {
    %c0_i32 = arith.constant 0 : i32
    %c0_i32_0 = arith.constant 0 : i32
    %c0_i32_1 = arith.constant 0 : i32
    %c0_i32_2 = arith.constant 0 : i32
    return %arg0, %c0_i32, %c0_i32_0, %c0_i32_1 : i32, i32, i32, i32
  }
}

</mosaic_0001>

<llo_original>
// kernel: tpu_custom_call.1
$region0: #{tpu_custom_call.1}
  #allocation0 [shape = 'u32[]', space=smem, size = 0x4, offset = 0x4, fixed_abs, tag = 'smem constant byte address 0x4 - core index']
  #allocation1 [shape = 'u32[144,128]{1,0:T(1,128)}', space=vmem, size = 0x12000, scoped, tag = 'internal scratch']
  %s0 = inlined_call_operand.hbm [shape: f32[2,1,4,256], index: 0, kind: input, shape index: {}]
  %s1 = inlined_call_operand.hbm [shape: f32[4,4], index: 1, kind: input, shape index: {}]
  %s2 = inlined_call_operand.vmem [shape: f32[1,4], index: 2, kind: input, shape index: {}]
  %s3 = inlined_call_operand.vmem [shape: f32[4,4], index: 3, kind: input, shape index: {}]
  %s4 = inlined_call_operand.vmem [shape: f32[1,4], index: 4, kind: input, shape index: {}]
  %s5 = inlined_call_operand.hbm [shape: f32[2,1,4,256], index: 5, kind: output, shape index: {}]
  %s6 = sld [smem:[#allocation0]]
  $region61: #{tpu_custom_call.1} parent=0
    _
  %s8 = ssub.s32 1, %s6
  %s9 = scalar_select 0, %s8, %s6
  $region1: #{tpu_custom_call.1} parent=0
    #allocation2 [shape = 'u8[8192]{0}', space=vmem, size = 0x2000, scoped, tag = 'input window, operand 0']
    #allocation3 [shape = 's32[2]{0}', space=sflag, size = 0x8, scoped, tag = 'scoped memory for tpu_custom_call.1']
    #allocation4 [shape = 's32[2]{0}', space=sflag, size = 0x8, scoped, tag = 'scoped memory for tpu_custom_call.1']
    #allocation5 [shape = 'u8[2048]{0}', space=vmem, size = 0x800, scoped, tag = 'input window, operand 1, single buffered']
    #allocation6 [shape = 's32[1]{0}', space=sflag, size = 0x4, scoped, tag = 'scoped memory for tpu_custom_call.1']
    #allocation7 [shape = 'u8[8192]{0}', space=vmem, size = 0x2000, scoped, tag = 'output window, operand 0']
    %10 = vsyncpa [#allocation3], 0
    %s11 = scalar_lea.sflag [#allocation3], 1
    %12 = vsyncpa %s11, 0
    %13 = vsyncpa [#allocation6], 0
    %14 = vsyncpa [#allocation4], 0
    %s15 = scalar_lea.sflag [#allocation4], 1
    %16 = vsyncpa %s15, 0
    loop: start=0, step=1, limit=4
    $region2: #{tpu_custom_call.1} parent=1 // loop_pre_header
      _
    $region3: #{tpu_custom_call.1} parent=1 // loop_header
      %s18 = sphi 0, %s22
      %p19 = scmp.ge.s32.totalorder %s18, 4
      %s28 = sphi 0, %s30
      %s31 = sphi 0, %s28
      %s32 = sphi 0, %s31
      %s48 = sphi 0, %s32
      %s52 = sphi 0, %s52
      %s54 = sphi 0, %s52
      %s55 = sphi 0, %s54
      %s69 = sphi 0, %s55
      %s73 = sphi 0, %s73
      %s75 = sphi 0, %s73
      %s76 = sphi 0, %s75
      %s90 = sphi 0, %s76
      %s94 = sphi 0, %s94
      %s96 = sphi 0, %s94
      %s97 = sphi 0, %s96
      %s111 = sphi 0, %s97
      %s115 = sphi 0, %s115
      %s117 = sphi 0, %s115
      %s118 = sphi 0, %s117
      %s132 = sphi 0, %s118
      %s138 = sphi 0, %s140
      %s141 = sphi 0, %s138
      %s142 = sphi 0, %s141
      %s158 = sphi 0, %s142
    $region4: #{tpu_custom_call.1} parent=1 // loop_header_branch
      %21 = sbr.rel (%p19) target = $region8
    $region5: #{tpu_custom_call.1} parent=1 // loop_body
      %s23 = ssub.s32 %s18, 1
      %s24 = ssub.s32 %s18, 2
      %s25 = sadd.s32 %s18, 1
      %s26 = ssub.s32 %s18, %s25
      %p27 = scmp.eq.s32.totalorder %s26, 0
      %s29 = sadd.s32 %s28, 1
      %s30 = scalar_select %p27, %s28, %s29
      %p33 = pneg %p27
      %p34 = scmp.eq.s32.totalorder %s18, 1
      %p35 = por %p33, %p34
      %p36 = scmp.ne.s32.totalorder %s28, %s31
      %p37 = scmp.eq.s32.totalorder %s18, 0
      %p38 = por %p36, %p37
      %p39 = scmp.ne.s32.totalorder %s28, %s31
      %p40 = scmp.eq.s32.totalorder %s23, 1
      %p41 = por %p39, %p40
      %p42 = scmp.ne.s32.totalorder %s31, %s32
      %p43 = scmp.eq.s32.totalorder %s23, 0
      %p44 = por %p42, %p43
      %p45 = scmp.ne.s32.totalorder %s31, %s32
      %p46 = scmp.eq.s32.totalorder %s24, 1
      %p47 = por %p45, %p46
      %p49 = scmp.ne.s32.totalorder %s32, %s48
      %p50 = scmp.eq.s32.totalorder %s24, 0
      %p51 = por %p49, %p50
      %s53 = sadd.s32 %s52, 1
      %p56 = scmp.eq.s32.totalorder %s18, 1
      %p57 = scmp.ne.s32.totalorder %s52, %s54
      %p58 = scmp.eq.s32.totalorder %s18, 0
      %p59 = por %p57, %p58
      %p60 = scmp.ne.s32.totalorder %s52, %s54
      %p61 = scmp.eq.s32.totalorder %s23, 1
      %p62 = por %p60, %p61
      %p63 = scmp.ne.s32.totalorder %s54, %s55
      %p64 = scmp.eq.s32.totalorder %s23, 0
      %p65 = por %p63, %p64
      %p66 = scmp.ne.s32.totalorder %s54, %s55
      %p67 = scmp.eq.s32.totalorder %s24, 1
      %p68 = por %p66, %p67
      %p70 = scmp.ne.s32.totalorder %s55, %s69
      %p71 = scmp.eq.s32.totalorder %s24, 0
      %p72 = por %p70, %p71
      %s74 = sadd.s32 %s73, 1
      %p77 = scmp.eq.s32.totalorder %s18, 1
      %p78 = scmp.ne.s32.totalorder %s73, %s75
      %p79 = scmp.eq.s32.totalorder %s18, 0
      %p80 = por %p78, %p79
      %p81 = scmp.ne.s32.totalorder %s73, %s75
      %p82 = scmp.eq.s32.totalorder %s23, 1
      %p83 = por %p81, %p82
      %p84 = scmp.ne.s32.totalorder %s75, %s76
      %p85 = scmp.eq.s32.totalorder %s23, 0
      %p86 = por %p84, %p85
      %p87 = scmp.ne.s32.totalorder %s75, %s76
      %p88 = scmp.eq.s32.totalorder %s24, 1
      %p89 = por %p87, %p88
      %p91 = scmp.ne.s32.totalorder %s76, %s90
      %p92 = scmp.eq.s32.totalorder %s24, 0
      %p93 = por %p91, %p92
      %s95 = sadd.s32 %s94, 1
      %p98 = scmp.eq.s32.totalorder %s18, 1
      %p99 = scmp.ne.s32.totalorder %s94, %s96
      %p100 = scmp.eq.s32.totalorder %s18, 0
      %p101 = por %p99, %p100
      %p102 = scmp.ne.s32.totalorder %s94, %s96
      %p103 = scmp.eq.s32.totalorder %s23, 1
      %p104 = por %p102, %p103
      %p105 = scmp.ne.s32.totalorder %s96, %s97
      %p106 = scmp.eq.s32.totalorder %s23, 0
      %p107 = por %p105, %p106
      %p108 = scmp.ne.s32.totalorder %s96, %s97
      %p109 = scmp.eq.s32.totalorder %s24, 1
      %p110 = por %p108, %p109
      %p112 = scmp.ne.s32.totalorder %s97, %s111
      %p113 = scmp.eq.s32.totalorder %s24, 0
      %p114 = por %p112, %p113
      %s116 = sadd.s32 %s115, 1
      %p119 = scmp.eq.s32.totalorder %s18, 1
      %p120 = scmp.ne.s32.totalorder %s115, %s117
      %p121 = scmp.eq.s32.totalorder %s18, 0
      %p122 = por %p120, %p121
      %p123 = scmp.ne.s32.totalorder %s115, %s117
      %p124 = scmp.eq.s32.totalorder %s23, 1
      %p125 = por %p123, %p124
      %p126 = scmp.ne.s32.totalorder %s117, %s118
      %p127 = scmp.eq.s32.totalorder %s23, 0
      %p128 = por %p126, %p127
      %p129 = scmp.ne.s32.totalorder %s117, %s118
      %p130 = scmp.eq.s32.totalorder %s24, 1
      %p131 = por %p129, %p130
      %p133 = scmp.ne.s32.totalorder %s118, %s132
      %p134 = scmp.eq.s32.totalorder %s24, 0
      %p135 = por %p133, %p134
      %s136 = ssub.s32 %s18, %s25
      %p137 = scmp.eq.s32.totalorder %s136, 0
      %s139 = sadd.s32 %s138, 1
      %s140 = scalar_select %p137, %s138, %s139
      %p143 = pneg %p137
      %p144 = scmp.eq.s32.totalorder %s18, 1
      %p145 = por %p143, %p144
      %p146 = scmp.ne.s32.totalorder %s138, %s141
      %p147 = scmp.eq.s32.totalorder %s18, 0
      %p148 = por %p146, %p147
      %p149 = scmp.ne.s32.totalorder %s138, %s141
      %p150 = scmp.eq.s32.totalorder %s23, 1
      %p151 = por %p149, %p150
      %p152 = scmp.ne.s32.totalorder %s141, %s142
      %p153 = scmp.eq.s32.totalorder %s23, 0
      %p154 = por %p152, %p153
      %p155 = scmp.ne.s32.totalorder %s141, %s142
      %p156 = scmp.eq.s32.totalorder %s24, 1
      %p157 = por %p155, %p156
      %p159 = scmp.ne.s32.totalorder %s142, %s158
      %p160 = scmp.eq.s32.totalorder %s24, 0
      %p161 = por %p159, %p160
      %p162 = scmp.le.s32.totalorder 1, %s18
      %p163 = scmp.lt.s32.totalorder %s18, 3
      %p164 = pnand %p162, %p163
      %p165 = pneg %p164
      // Predicated region
      $region9: #{tpu_custom_call.1} parent=5 // pred_check
        _
      $region10: #{tpu_custom_call.1} parent=5 // pred_check_branch
        %167 = sbr.rel (%p164) target = $region12
      $region11: #{tpu_custom_call.1} parent=5 // pred_region
        %s168 = ssub.s32 %s18, 1
        // Predicated region
        $region13: #{tpu_custom_call.1} parent=11 // pred_check
          %p169 = pneg %p65
        $region14: #{tpu_custom_call.1} parent=11 // pred_check_branch
          %171 = sbr.rel (%p169) target = $region16
        $region15: #{tpu_custom_call.1} parent=11 // pred_region
          %s173 = ssub.s32 64, 64
          %174 = vsyncadd [#allocation6], %s173
          %s176 = sshll.u32 [#allocation5], 4
          %s177 = int_to_ptr.vmem [resolvable:$true] %s176
          %179 = dma.hbm_to_vmem [thread:$0]  %s1, 64, %s177, [#allocation6]
        $region16: #{tpu_custom_call.1} parent=11 // pred_fallthru
          _
        // Predicated region
        $region17: #{tpu_custom_call.1} parent=11 // pred_check
          %p180 = pneg %p86
        $region18: #{tpu_custom_call.1} parent=11 // pred_check_branch
          %182 = sbr.rel (%p180) target = $region20
        $region19: #{tpu_custom_call.1} parent=11 // pred_region
          _
        $region20: #{tpu_custom_call.1} parent=11 // pred_fallthru
          _
        // Predicated region
        $region21: #{tpu_custom_call.1} parent=11 // pred_check
          %p183 = pneg %p107
        $region22: #{tpu_custom_call.1} parent=11 // pred_check_branch
          %185 = sbr.rel (%p183) target = $region24
        $region23: #{tpu_custom_call.1} parent=11 // pred_region
          _
        $region24: #{tpu_custom_call.1} parent=11 // pred_fallthru
          _
        // Predicated region
        $region25: #{tpu_custom_call.1} parent=11 // pred_check
          %p186 = pneg %p128
        $region26: #{tpu_custom_call.1} parent=11 // pred_check_branch
          %188 = sbr.rel (%p186) target = $region28
        $region27: #{tpu_custom_call.1} parent=11 // pred_region
          _
        $region28: #{tpu_custom_call.1} parent=11 // pred_fallthru
          _
      $region12: #{tpu_custom_call.1} parent=5 // pred_fallthru
        _
      %p189 = scmp.lt.s32.totalorder %s18, 2
      // Predicated region
      $region29: #{tpu_custom_call.1} parent=5 // pred_check
        %p190 = pneg %p189
      $region30: #{tpu_custom_call.1} parent=5 // pred_check_branch
        %192 = sbr.rel (%p190) target = $region32
      $region31: #{tpu_custom_call.1} parent=5 // pred_region
        // Predicated region
        $region33: #{tpu_custom_call.1} parent=31 // pred_check
          %p193 = pneg %p38
        $region34: #{tpu_custom_call.1} parent=31 // pred_check_branch
          %195 = sbr.rel (%p193) target = $region36
        $region35: #{tpu_custom_call.1} parent=31 // pred_region
          %s196 = sand.u32 %s28, 1
          %s197 = scalar_lea.sflag [#allocation3], %s196
          %s198 = sand.u32 %s28, 1
          %s199 = smul.addr %s198, 8
          %s200 = scalar_lea.vmem [#allocation2], %s199
          %s202 = ssub.s32 128, 128
          %203 = vsyncadd %s197, %s202
          %s204 = smul.addr %s18, 2
          %s205 = smul.addr %s204, 64
          %s206 = scalar_lea.hbm %s0, %s205
          %s208 = sshll.u32 %s200, 4
          %s209 = int_to_ptr.vmem [resolvable:$true] %s208
          %211 = dma.hbm_to_vmem [thread:$0]  %s206, 128, %s209, %s197
        $region36: #{tpu_custom_call.1} parent=31 // pred_fallthru
          _
      $region32: #{tpu_custom_call.1} parent=5 // pred_fallthru
        _
      %p212 = scmp.le.s32.totalorder 1, %s18
      %p213 = scmp.lt.s32.totalorder %s18, 3
      %p214 = pnand %p212, %p213
      %p215 = pneg %p214
      // Predicated region
      $region37: #{tpu_custom_call.1} parent=5 // pred_check
        _
      $region38: #{tpu_custom_call.1} parent=5 // pred_check_branch
        %217 = sbr.rel (%p214) target = $region40
      $region39: #{tpu_custom_call.1} parent=5 // pred_region
        %s218 = ssub.s32 %s18, 1
        %s219 = sand.u32 %s31, 1
        %s220 = scalar_lea.sflag [#allocation3], %s219
        %s221 = sand.u32 %s31, 1
        %s222 = smul.addr %s221, 8
        %s223 = scalar_lea.vmem [#allocation2], %s222
        // Predicated region
        $region41: #{tpu_custom_call.1} parent=39 // pred_check
          %p224 = pneg %p44
        $region42: #{tpu_custom_call.1} parent=39 // pred_check_branch
          %226 = sbr.rel (%p224) target = $region44
        $region43: #{tpu_custom_call.1} parent=39 // pred_region
          %227 = dma.done %s220, 128
        $region44: #{tpu_custom_call.1} parent=39 // pred_fallthru
          _
        // Predicated region
        $region45: #{tpu_custom_call.1} parent=39 // pred_check
          %p228 = pneg %p65
        $region46: #{tpu_custom_call.1} parent=39 // pred_check_branch
          %230 = sbr.rel (%p228) target = $region48
        $region47: #{tpu_custom_call.1} parent=39 // pred_region
          %231 = dma.done [#allocation6], 64
        $region48: #{tpu_custom_call.1} parent=39 // pred_fallthru
          _
        %s232 = sand.u32 %s31, 1
        %s233 = scalar_lea.sflag [#allocation3], %s232
        %s234 = sand.u32 %s31, 1
        %s235 = smul.addr %s234, 8
        %s236 = scalar_lea.vmem [#allocation2], %s235
        %p237 = pneg %p44
        %p238 = pneg %p41
        %p239 = pneg %p65
        %p240 = pneg %p62
        %p241 = pneg %p86
        %p242 = pneg %p83
        %p243 = pneg %p107
        %p244 = pneg %p104
        %p245 = pneg %p128
        %p246 = pneg %p125
        %p247 = pneg %p154
        %p248 = pneg %p151
        %s249 = sand.u32 %s141, 1
        %s250 = scalar_lea.sflag [#allocation4], %s249
        %s251 = sand.u32 %s141, 1
        %s252 = smul.addr %s251, 8
        %s253 = scalar_lea.vmem [#allocation7], %s252
        %v254 = vld [vmem:[%s223] sm:$0xff]
        %v256 = vcombine.high %v254, %v254
        %vm258 = vcmask 1043456
        %v259 = vsel %vm258, %v254, 0.0
        %v260 = vsel %vm258, %v256, 0.0
        %v261 = vadd.f32 %v259, %v260
        %262 = vadd.xlane.f32.xlu0 %v261
        %v263 = vpop.xlane.xlu0 %262
        %v264 = vmul.f32 %v263, 0.00390625
        %v265 = vld [vmem:[#allocation5] sm:$0xf]
        %v266 = vld [vmem:[%s2] sm:$0x1]
        %v268 = vlaneseq
        %v269 = vand.u32 %v268, 127
        %v270 = vlaneseq
        %v271 = vshrl.u32 %v270, 7
        %v272 = vsub.s32 %v269, %v271
        %v273 = vrot.slane %v264, %v272
        %vm274 = vcmask 31744
        %v275 = vsel %vm274, %v273, 0
        %v278 = vsel %vm258, %v265, 0
        %280 = vmatprep.subr.mxu0 0.0
        %281 = vmatpush1.msra.mxu0 0.0
        %282 = vmatprep.subr.mxu0 0.0
        %283 = vmatpush1.msra.mxu0 0.0
        %284 = vmatprep.subr.mxu0 0.0
        %285 = vmatpush1.msra.mxu0 0.0
        %286 = vmatprep.subr.mxu0 0.0
        %287 = vmatpush1.msra.mxu0 0.0
        %288 = vmatprep.subr.mxu0 0.0
        %289 = vmatpush1.msra.mxu0 0.0
        %290 = vmatprep.subr.mxu0 0.0
        %291 = vmatpush1.msra.mxu0 0.0
        %292 = vmatprep.subr.mxu0 0.0
        %293 = vmatpush1.msra.mxu0 0.0
        %294 = vmatprep.subr.mxu0 0.0
        %295 = vmatpush1.msra.mxu0 0.0
        %296 = vmatprep.subr.mxu0 0.0
        %297 = vmatpush1.msra.mxu0 0.0
        %298 = vmatprep.subr.mxu0 0.0
        %299 = vmatpush1.msra.mxu0 0.0
        %300 = vmatprep.subr.mxu0 0.0
        %301 = vmatpush1.msra.mxu0 0.0
        %302 = vmatprep.subr.mxu0 0.0
        %303 = vmatpush1.msra.mxu0 0.0
        %304 = vmatprep.subr.mxu0 0.0
        %305 = vmatpush1.msra.mxu0 0.0
        %306 = vmatprep.subr.mxu0 0.0
        %307 = vmatpush1.msra.mxu0 0.0
        %308 = vmatprep.subr.mxu0 0.0
        %309 = vmatpush1.msra.mxu0 0.0
        %310 = vmatprep.subr.mxu0 0.0
        %311 = vmatpush1.msra.mxu0 %v278
        %312 = vmatprep.subr.mxu0 0.0
        %313 = vmatpush2.msra.mxu0 0.0
        %314 = vmatprep.subr.mxu0 0.0
        %315 = vmatpush2.msra.mxu0 0.0
        %316 = vmatprep.subr.mxu0 0.0
        %317 = vmatpush2.msra.mxu0 0.0
        %318 = vmatprep.subr.mxu0 0.0
        %319 = vmatpush2.msra.mxu0 0.0
        %320 = vmatprep.subr.mxu0 0.0
        %321 = vmatpush2.msra.mxu0 0.0
        %322 = vmatprep.subr.mxu0 0.0
        %323 = vmatpush2.msra.mxu0 0.0
        %324 = vmatprep.subr.mxu0 0.0
        %325 = vmatpush2.msra.mxu0 0.0
        %326 = vmatprep.subr.mxu0 0.0
        %327 = vmatpush2.msra.mxu0 0.0
        %328 = vmatprep.subr.mxu0 0.0
        %329 = vmatpush2.msra.mxu0 0.0
        %330 = vmatprep.subr.mxu0 0.0
        %331 = vmatpush2.msra.mxu0 0.0
        %332 = vmatprep.subr.mxu0 0.0
        %333 = vmatpush2.msra.mxu0 0.0
        %334 = vmatprep.subr.mxu0 0.0
        %335 = vmatpush2.msra.mxu0 0.0
        %336 = vmatprep.subr.mxu0 0.0
        %337 = vmatpush2.msra.mxu0 0.0
        %338 = vmatprep.subr.mxu0 0.0
        %339 = vmatpush2.msra.mxu0 0.0
        %340 = vmatprep.subr.mxu0 0.0
        %341 = vmatpush2.msra.mxu0 0.0
        %342 = vmatprep.subr.mxu0 0.0
        %343 = vmatpush2.msra.mxu0 0.0
        %344 = vmatprep.mubr.f32.mxu0 0.0
        %345 = vmatmul.mubr.f32.gmra.mxu0 %v275
        %v346 = vpop.f32.mrf.mxu0
        %v347 = vadd.f32 %v266, %v346
        %v348 = vpop.f32.mrf.mxu0
        %349 = vdwg.mxu0
        %v350 = vmax.f32 %v347, 0.0
        %v351 = vld [vmem:[%s3] sm:$0xf]
        %v352 = vld [vmem:[%s4] sm:$0x1]
        %v354 = vsel %vm274, %v350, 0
        %v357 = vsel %vm258, %v351, 0
        %359 = vmatprep.subr.mxu0 0.0
        %360 = vmatpush1.msra.mxu0 0.0
        %361 = vmatprep.subr.mxu0 0.0
        %362 = vmatpush1.msra.mxu0 0.0
        %363 = vmatprep.subr.mxu0 0.0
        %364 = vmatpush1.msra.mxu0 0.0
        %365 = vmatprep.subr.mxu0 0.0
        %366 = vmatpush1.msra.mxu0 0.0
        %367 = vmatprep.subr.mxu0 0.0
        %368 = vmatpush1.msra.mxu0 0.0
        %369 = vmatprep.subr.mxu0 0.0
        %370 = vmatpush1.msra.mxu0 0.0
        %371 = vmatprep.subr.mxu0 0.0
        %372 = vmatpush1.msra.mxu0 0.0
        %373 = vmatprep.subr.mxu0 0.0
        %374 = vmatpush1.msra.mxu0 0.0
        %375 = vmatprep.subr.mxu0 0.0
        %376 = vmatpush1.msra.mxu0 0.0
        %377 = vmatprep.subr.mxu0 0.0
        %378 = vmatpush1.msra.mxu0 0.0
        %379 = vmatprep.subr.mxu0 0.0
        %380 = vmatpush1.msra.mxu0 0.0
        %381 = vmatprep.subr.mxu0 0.0
        %382 = vmatpush1.msra.mxu0 0.0
        %383 = vmatprep.subr.mxu0 0.0
        %384 = vmatpush1.msra.mxu0 0.0
        %385 = vmatprep.subr.mxu0 0.0
        %386 = vmatpush1.msra.mxu0 0.0
        %387 = vmatprep.subr.mxu0 0.0
        %388 = vmatpush1.msra.mxu0 0.0
        %389 = vmatprep.subr.mxu0 0.0
        %390 = vmatpush1.msra.mxu0 %v357
        %391 = vmatprep.subr.mxu0 0.0
        %392 = vmatpush2.msra.mxu0 0.0
        %393 = vmatprep.subr.mxu0 0.0
        %394 = vmatpush2.msra.mxu0 0.0
        %395 = vmatprep.subr.mxu0 0.0
        %396 = vmatpush2.msra.mxu0 0.0
        %397 = vmatprep.subr.mxu0 0.0
        %398 = vmatpush2.msra.mxu0 0.0
        %399 = vmatprep.subr.mxu0 0.0
        %400 = vmatpush2.msra.mxu0 0.0
        %401 = vmatprep.subr.mxu0 0.0
        %402 = vmatpush2.msra.mxu0 0.0
        %403 = vmatprep.subr.mxu0 0.0
        %404 = vmatpush2.msra.mxu0 0.0
        %405 = vmatprep.subr.mxu0 0.0
        %406 = vmatpush2.msra.mxu0 0.0
        %407 = vmatprep.subr.mxu0 0.0
        %408 = vmatpush2.msra.mxu0 0.0
        %409 = vmatprep.subr.mxu0 0.0
        %410 = vmatpush2.msra.mxu0 0.0
        %411 = vmatprep.subr.mxu0 0.0
        %412 = vmatpush2.msra.mxu0 0.0
        %413 = vmatprep.subr.mxu0 0.0
        %414 = vmatpush2.msra.mxu0 0.0
        %415 = vmatprep.subr.mxu0 0.0
        %416 = vmatpush2.msra.mxu0 0.0
        %417 = vmatprep.subr.mxu0 0.0
        %418 = vmatpush2.msra.mxu0 0.0
        %419 = vmatprep.subr.mxu0 0.0
        %420 = vmatpush2.msra.mxu0 0.0
        %421 = vmatprep.subr.mxu0 0.0
        %422 = vmatpush2.msra.mxu0 0.0
        %423 = vmatprep.mubr.f32.mxu0 0.0
        %424 = vmatmul.mubr.f32.gmra.mxu0 %v354
        %v425 = vpop.f32.mrf.mxu0
        %v426 = vadd.f32 %v352, %v425
        %v427 = vpop.f32.mrf.mxu0
        %428 = vdwg.mxu0
        %v429 = vadd.f32 %v426, 3.0
        %v430 = vmax.f32 %v429, 0.0
        %v431 = vmin.f32 %v430, 6.0
        %v432 = vmul.f32 %v431, 0.16666667
        %v433 = vlaneseq
        %v434 = vshrl.u32 %v433, 7
        %v435 = vsub.s32 0, %v434
        %v436 = vrot.slane %v432, %v435
        %438 = vbcast.lane.b32.xlu0 %v436, 256
        %v439 = vpop.permute.xlu0 %438
        %v442 = vunpack.c.l.s4 839922192
        %v443 = vunpack.c.0.s8 %v442
        %v444 = vlaneseq
        %v445 = vshrl.u32 %v444, 7
        %v446 = vsub.s32 %v443, %v445
        %v447 = vrot.slane %v439, %v446
        %v449 = vmul.f32 %v254, %v447
        %450 = vst [vmem:[%s253] sm:$0xff] %v449
        %s451 = sand.u32 %s141, 1
        %s452 = scalar_lea.sflag [#allocation4], %s451
        %s453 = sand.u32 %s141, 1
        %s454 = smul.addr %s453, 8
        %s455 = scalar_lea.vmem [#allocation7], %s454
        // Predicated region
        $region49: #{tpu_custom_call.1} parent=39 // pred_check
          %p456 = pneg %p151
        $region50: #{tpu_custom_call.1} parent=39 // pred_check_branch
          %458 = sbr.rel (%p456) target = $region52
        $region51: #{tpu_custom_call.1} parent=39 // pred_region
          %s460 = ssub.s32 128, 128
          %461 = vsyncadd %s452, %s460
          %s462 = smul.addr %s23, 2
          %s463 = smul.addr %s462, 64
          %s464 = scalar_lea.hbm %s5, %s463
          %s466 = sshll.u32 %s455, 4
          %s467 = int_to_ptr.vmem [resolvable:$true] %s466
          %469 = dma.vmem_to_hbm [thread:$0]  %s467, 128, %s464, %s452
        $region52: #{tpu_custom_call.1} parent=39 // pred_fallthru
          _
      $region40: #{tpu_custom_call.1} parent=5 // pred_fallthru
        _
      %p470 = scmp.le.s32.totalorder 2, %s18
      // Predicated region
      $region53: #{tpu_custom_call.1} parent=5 // pred_check
        %p471 = pneg %p470
      $region54: #{tpu_custom_call.1} parent=5 // pred_check_branch
        %473 = sbr.rel (%p471) target = $region56
      $region55: #{tpu_custom_call.1} parent=5 // pred_region
        %s474 = ssub.s32 %s18, 2
        // Predicated region
        $region57: #{tpu_custom_call.1} parent=55 // pred_check
          %p475 = pneg %p157
        $region58: #{tpu_custom_call.1} parent=55 // pred_check_branch
          %477 = sbr.rel (%p475) target = $region60
        $region59: #{tpu_custom_call.1} parent=55 // pred_region
          %s478 = sand.u32 %s142, 1
          %s479 = scalar_lea.sflag [#allocation4], %s478
          %s480 = sand.u32 %s142, 1
          %s481 = smul.addr %s480, 8
          %s482 = scalar_lea.vmem [#allocation7], %s481
          %483 = dma.done %s479, 128
        $region60: #{tpu_custom_call.1} parent=55 // pred_fallthru
          _
      $region56: #{tpu_custom_call.1} parent=5 // pred_fallthru
        _
    $region6: #{tpu_custom_call.1} parent=1 // loop_footer
      %s22 = sadd.s32 1, %s18
    $region7: #{tpu_custom_call.1} parent=1 // loop_footer_branch
      %17 = sbr.rel target = $region3
    $region8: #{tpu_custom_call.1} parent=1 // loop_exit
      _
    %484 = vsyncpa [#allocation3], 1
    %s485 = scalar_lea.sflag [#allocation3], 1
    %486 = vsyncpa %s485, 1
    %487 = vsyncpa [#allocation6], 1
    %488 = vsyncpa [#allocation4], 1
    %s489 = scalar_lea.sflag [#allocation4], 1
    %490 = vsyncpa %s489, 1

</llo_original>
